<compile_context>
chip_gen: v5e
topology: v5e:2x2
jax: 0.10.0
libtpu: 0.0.40
codegen_flags: <defaults>
</compile_context>

<pallas_src>
import functools

import jax
import jax.numpy as jnp
from jax.experimental import pallas as pl
from jax.experimental.pallas import tpu as pltpu

HIDDEN = 256


def _round_up(x, m):
    return ((x + m - 1) // m) * m


def _mlp_kernel(x_ref, w1_ref, b1_ref, w2_ref, b2_ref, w3_ref, b3_ref, o_ref):
    # Three MXU matmuls (bf16 operands, f32 accumulate) fused with bias add + ReLU (VPU, f32).
    x = x_ref[...]
    h1 = jnp.dot(x, w1_ref[...], preferred_element_type=jnp.float32) + b1_ref[...]
    h1 = jnp.maximum(h1, 0.0)
    h2 = jnp.dot(h1.astype(w2_ref.dtype), w2_ref[...],
                 preferred_element_type=jnp.float32) + b2_ref[...]
    h2 = jnp.maximum(h2, 0.0)
    out = jnp.dot(h2.astype(w3_ref.dtype), w3_ref[...],
                  preferred_element_type=jnp.float32) + b3_ref[...]
    o_ref[...] = out.astype(o_ref.dtype)


@functools.partial(jax.jit, static_argnames=("tm", "compute_dtype"))
def custom_trading_model_forward(x, params, *, tm=256, compute_dtype=jnp.bfloat16):
    w1, b1, w2, b2, w3, b3 = params
    batch, in_dim = x.shape
    hidden = w1.shape[1]
    out_dim = w3.shape[1]

    # --- Lane-dense output: pad final layer width up to a multiple of 128. ---
    out_pad = _round_up(out_dim, 128)
    if out_pad != out_dim:
        w3 = jnp.pad(w3, ((0, 0), (0, out_pad - out_dim)))
        b3 = jnp.pad(b3, ((0, 0), (0, out_pad - out_dim)))

    # --- Batch tiling: TM rows per grid step (single step for tiny batches). ---
    batch_pad = _round_up(batch, 8)
    tm = min(tm, batch_pad)
    batch_pad = _round_up(batch_pad, tm)
    if batch_pad != batch:
        x = jnp.pad(x, ((0, batch_pad - batch), (0, 0)))
    grid = (batch_pad // tm,)

    # --- bf16 MXU operands, f32 biases/elementwise. ---
    xc = x.astype(compute_dtype)
    w1c = w1.astype(compute_dtype)
    w2c = w2.astype(compute_dtype)
    w3c = w3.astype(compute_dtype)
    b1f = b1.astype(jnp.float32)
    b2f = b2.astype(jnp.float32)
    b3f = b3.astype(jnp.float32)

    flops = 2 * batch_pad * (in_dim * hidden + hidden * hidden + hidden * out_pad)
    bytes_accessed = (
        xc.size * xc.dtype.itemsize
        + sum(a.size * a.dtype.itemsize for a in (w1c, w2c, w3c, b1f, b2f, b3f))
        + batch_pad * out_pad * 4
    )

    # Weights/biases: constant index_map -> fetched once, VMEM-resident across steps.
    const = lambda shape: pl.BlockSpec(shape, lambda i, _s=shape: (0,) * len(_s))

    out = pl.pallas_call(
        _mlp_kernel,
        out_shape=jax.ShapeDtypeStruct((batch_pad, out_pad), jnp.float32),
        grid_spec=pltpu.PrefetchScalarGridSpec(
            num_scalar_prefetch=0,
            grid=grid,
            in_specs=[
                pl.BlockSpec((tm, in_dim), lambda i: (i, 0)),
                const(w1c.shape),
                const(b1f.shape),
                const(w2c.shape),
                const(b2f.shape),
                const(w3c.shape),
                const(b3f.shape),
            ],
            out_specs=pl.BlockSpec((tm, out_pad), lambda i: (i, 0)),
        ),
        compiler_params=pltpu.CompilerParams(
            dimension_semantics=("parallel",),
        ),
        cost_estimate=pl.CostEstimate(
            flops=flops, transcendentals=0, bytes_accessed=bytes_accessed
        ),
    )(xc, w1c, b1f, w2c, b2f, w3c, b3f)

    return out[:batch, :out_dim]


def init_params(key, input_dim, output_dim):
    """Deterministic init mirroring PyTorch nn.Linear's U(-1/sqrt(fan_in), 1/sqrt(fan_in))."""
    ks = jax.random.split(key, 6)

    def linear(kw, kb, fan_in, fan_out):
        bound = 1.0 / jnp.sqrt(fan_in)
        w = jax.random.uniform(kw, (fan_in, fan_out), jnp.float32, -bound, bound)
        b = jax.random.uniform(kb, (1, fan_out), jnp.float32, -bound, bound)
        return w, b

    w1, b1 = linear(ks[0], ks[1], input_dim, HIDDEN)
    w2, b2 = linear(ks[2], ks[3], HIDDEN, HIDDEN)
    w3, b3 = linear(ks[4], ks[5], HIDDEN, output_dim)
    return (w1, b1, w2, b2, w3, b3)


def _reference_f32(x, params):
    w1, b1, w2, b2, w3, b3 = params
    h1 = jnp.maximum(x @ w1 + b1, 0.0)
    h2 = jnp.maximum(h1 @ w2 + b2, 0.0)
    return h2 @ w3 + b3


def _reference_bf16(x, params):
    # Same math as the kernel: bf16 MXU operands, f32 accumulation / elementwise.
    w1, b1, w2, b2, w3, b3 = params
    c = lambda a: a.astype(jnp.bfloat16)
    h1 = jnp.maximum(jnp.dot(c(x), c(w1), preferred_element_type=jnp.float32) + b1, 0.0)
    h2 = jnp.maximum(jnp.dot(c(h1), c(w2), preferred_element_type=jnp.float32) + b2, 0.0)
    return jnp.dot(c(h2), c(w3), preferred_element_type=jnp.float32) + b3


if __name__ == "__main__":
    input_dim, output_dim = 32, 8
    key = jax.random.PRNGKey(0)
    k_x, k_p, k_x2 = jax.random.split(key, 3)
    params = init_params(k_p, input_dim, output_dim)

    # Tiny case: single grid step (matches the toy PyTorch usage).
    x_small = jax.random.normal(k_x, (8, input_dim), dtype=jnp.float32)
    out_small = custom_trading_model_forward(x_small, params)
    jax.block_until_ready(out_small)
    assert out_small.shape == (8, output_dim)
    assert jnp.allclose(out_small, _reference_bf16(x_small, params), atol=1e-4, rtol=1e-4)
    assert jnp.allclose(out_small, _reference_f32(x_small, params), atol=5e-2, rtol=5e-2)

    # Larger, non-multiple batch: exercises batch padding + multi-step tiled grid.
    x_big = jax.random.normal(k_x2, (300, input_dim), dtype=jnp.float32)
    out_big = custom_trading_model_forward(x_big, params)
    jax.block_until_ready(out_big)
    assert out_big.shape == (300, output_dim)
    assert jnp.allclose(out_big, _reference_bf16(x_big, params), atol=1e-4, rtol=1e-4)
    assert jnp.allclose(out_big, _reference_f32(x_big, params), atol=5e-2, rtol=5e-2)

    print("KERNEL_OK")
</pallas_src>

<mosaic_0001>
module attributes {stable_mosaic.version = 11 : i64} {
  func.func @_mlp_kernel(%arg0: i32, %arg1: memref<8x32xbf16, #tpu.memory_space<vmem>>, %arg2: memref<32x256xbf16, #tpu.memory_space<vmem>>, %arg3: memref<1x256xf32, #tpu.memory_space<vmem>>, %arg4: memref<256x256xbf16, #tpu.memory_space<vmem>>, %arg5: memref<1x256xf32, #tpu.memory_space<vmem>>, %arg6: memref<256x128xbf16, #tpu.memory_space<vmem>>, %arg7: memref<1x128xf32, #tpu.memory_space<vmem>>, %arg8: memref<8x128xf32, #tpu.memory_space<vmem>>) attributes {dimension_semantics = [#tpu.dimension_semantics<parallel>], iteration_bounds = array<i64: 1>, scalar_prefetch = 0 : i64, scratch_operands = 0 : i64, tpu.core_type = #tpu.core_type<tc>, window_params = [{transform_indices = @transform_0, window_bounds = array<i64: 8, 32>}, {pipeline_mode = #tpu.pipeline_mode<synchronous>, transform_indices = @transform_1, window_bounds = array<i64: 32, 256>}, {pipeline_mode = #tpu.pipeline_mode<synchronous>, transform_indices = @transform_2, window_bounds = array<i64: 1, 256>}, {pipeline_mode = #tpu.pipeline_mode<synchronous>, transform_indices = @transform_3, window_bounds = array<i64: 256, 256>}, {pipeline_mode = #tpu.pipeline_mode<synchronous>, transform_indices = @transform_4, window_bounds = array<i64: 1, 256>}, {pipeline_mode = #tpu.pipeline_mode<synchronous>, transform_indices = @transform_5, window_bounds = array<i64: 256, 128>}, {pipeline_mode = #tpu.pipeline_mode<synchronous>, transform_indices = @transform_6, window_bounds = array<i64: 1, 128>}, {transform_indices = @transform_7, window_bounds = array<i64: 8, 128>}]} {
    %c0 = arith.constant 0 : index
    %c0_0 = arith.constant 0 : index
    %0 = vector.load %arg1[%c0, %c0_0] : memref<8x32xbf16, #tpu.memory_space<vmem>>, vector<8x32xbf16>
    %c0_1 = arith.constant 0 : index
    %c0_2 = arith.constant 0 : index
    %1 = vector.load %arg2[%c0_1, %c0_2] : memref<32x256xbf16, #tpu.memory_space<vmem>>, vector<32x256xbf16>
    %cst = arith.constant dense<0.000000e+00> : vector<8x256xf32>
    %2 = tpu.matmul %0, %1, %cst {dimension_numbers = #tpu.dot_dimension_numbers<[1], [0], [0], [1], [0, 0, 1, 1], [], []>} : vector<8x32xbf16>, vector<32x256xbf16>, vector<8x256xf32> -> vector<8x256xf32>
    %c0_3 = arith.constant 0 : index
    %c0_4 = arith.constant 0 : index
    %3 = vector.load %arg3[%c0_3, %c0_4] : memref<1x256xf32, #tpu.memory_space<vmem>>, vector<1x256xf32>
    %4 = vector.broadcast %3 : vector<1x256xf32> to vector<8x256xf32>
    %5 = arith.addf %2, %4 : vector<8x256xf32>
    %cst_5 = arith.constant 0.000000e+00 : f32
    %6 = vector.broadcast %cst_5 : f32 to vector<8x256xf32>
    %7 = arith.maximumf %5, %6 : vector<8x256xf32>
    %8 = arith.truncf %7 : vector<8x256xf32> to vector<8x256xbf16>
    %c0_6 = arith.constant 0 : index
    %c0_7 = arith.constant 0 : index
    %9 = vector.load %arg4[%c0_6, %c0_7] : memref<256x256xbf16, #tpu.memory_space<vmem>>, vector<256x256xbf16>
    %cst_8 = arith.constant dense<0.000000e+00> : vector<8x256xf32>
    %10 = tpu.matmul %8, %9, %cst_8 {dimension_numbers = #tpu.dot_dimension_numbers<[1], [0], [0], [1], [0, 0, 1, 1], [], []>} : vector<8x256xbf16>, vector<256x256xbf16>, vector<8x256xf32> -> vector<8x256xf32>
    %c0_9 = arith.constant 0 : index
    %c0_10 = arith.constant 0 : index
    %11 = vector.load %arg5[%c0_9, %c0_10] : memref<1x256xf32, #tpu.memory_space<vmem>>, vector<1x256xf32>
    %12 = vector.broadcast %11 : vector<1x256xf32> to vector<8x256xf32>
    %13 = arith.addf %10, %12 : vector<8x256xf32>
    %cst_11 = arith.constant 0.000000e+00 : f32
    %14 = vector.broadcast %cst_11 : f32 to vector<8x256xf32>
    %15 = arith.maximumf %13, %14 : vector<8x256xf32>
    %16 = arith.truncf %15 : vector<8x256xf32> to vector<8x256xbf16>
    %c0_12 = arith.constant 0 : index
    %c0_13 = arith.constant 0 : index
    %17 = vector.load %arg6[%c0_12, %c0_13] : memref<256x128xbf16, #tpu.memory_space<vmem>>, vector<256x128xbf16>
    %cst_14 = arith.constant dense<0.000000e+00> : vector<8x128xf32>
    %18 = tpu.matmul %16, %17, %cst_14 {dimension_numbers = #tpu.dot_dimension_numbers<[1], [0], [0], [1], [0, 0, 1, 1], [], []>} : vector<8x256xbf16>, vector<256x128xbf16>, vector<8x128xf32> -> vector<8x128xf32>
    %c0_15 = arith.constant 0 : index
    %c0_16 = arith.constant 0 : index
    %19 = vector.load %arg7[%c0_15, %c0_16] : memref<1x128xf32, #tpu.memory_space<vmem>>, vector<1x128xf32>
    %20 = vector.broadcast %19 : vector<1x128xf32> to vector<8x128xf32>
    %21 = arith.addf %18, %20 : vector<8x128xf32>
    %c0_17 = arith.constant 0 : index
    %c0_18 = arith.constant 0 : index
    %22 = vector.load %arg8[%c0_17, %c0_18] : memref<8x128xf32, #tpu.memory_space<vmem>>, vector<8x128xf32>
    tpu.vector_store %arg8[%c0_17, %c0_18], %21 {strides = array<i32>} : memref<8x128xf32, #tpu.memory_space<vmem>>, vector<8x128xf32>,
    return
  }
  func.func @transform_0(%arg0: i32) -> (i32, i32) {
    %c0_i32 = arith.constant 0 : i32
    %c0_i32_0 = arith.constant 0 : i32
    return %arg0, %c0_i32 : i32, i32
  }
  func.func @transform_1(%arg0: i32) -> (i32, i32) {
    %c0_i32 = arith.constant 0 : i32
    %c0_i32_0 = arith.constant 0 : i32
    %c0_i32_1 = arith.constant 0 : i32
    return %c0_i32, %c0_i32_0 : i32, i32
  }
  func.func @transform_2(%arg0: i32) -> (i32, i32) {
    %c0_i32 = arith.constant 0 : i32
    %c0_i32_0 = arith.constant 0 : i32
    %c0_i32_1 = arith.constant 0 : i32
    return %c0_i32, %c0_i32_0 : i32, i32
  }
  func.func @transform_3(%arg0: i32) -> (i32, i32) {
    %c0_i32 = arith.constant 0 : i32
    %c0_i32_0 = arith.constant 0 : i32
    %c0_i32_1 = arith.constant 0 : i32
    return %c0_i32, %c0_i32_0 : i32, i32
  }
  func.func @transform_4(%arg0: i32) -> (i32, i32) {
    %c0_i32 = arith.constant 0 : i32
    %c0_i32_0 = arith.constant 0 : i32
    %c0_i32_1 = arith.constant 0 : i32
    return %c0_i32, %c0_i32_0 : i32, i32
  }
  func.func @transform_5(%arg0: i32) -> (i32, i32) {
    %c0_i32 = arith.constant 0 : i32
    %c0_i32_0 = arith.constant 0 : i32
    %c0_i32_1 = arith.constant 0 : i32
    return %c0_i32, %c0_i32_0 : i32, i32
  }
  func.func @transform_6(%arg0: i32) -> (i32, i32) {
    %c0_i32 = arith.constant 0 : i32
    %c0_i32_0 = arith.constant 0 : i32
    %c0_i32_1 = arith.constant 0 : i32
    return %c0_i32, %c0_i32_0 : i32, i32
  }
  func.func @transform_7(%arg0: i32) -> (i32, i32) {
    %c0_i32 = arith.constant 0 : i32
    %c0_i32_0 = arith.constant 0 : i32
    return %arg0, %c0_i32 : i32, i32
  }
}

</mosaic_0001>

<llo_original>
// kernel: custom_trading_model_forward.1
$region0: #{custom_trading_model_forward.1}
  #allocation0 [shape = 'u32[]', space=smem, size = 0x4, offset = 0x4, fixed_abs, tag = 'smem constant byte address 0x4 - core index']
  #allocation1 [shape = 'u32[72,128]{1,0:T(1,128)}', space=vmem, size = 0x9000, scoped, tag = 'internal scratch']
  %s0 = inlined_call_operand.vmem [shape: bf16[8,32], index: 0, kind: input, shape index: {}]
  %s1 = inlined_call_operand.vmem [shape: bf16[32,256], index: 1, kind: input, shape index: {}]
  %s2 = inlined_call_operand.vmem [shape: f32[1,256], index: 2, kind: input, shape index: {}]
  %s3 = inlined_call_operand.vmem [shape: bf16[256,256], index: 3, kind: input, shape index: {}]
  %s4 = inlined_call_operand.vmem [shape: f32[1,256], index: 4, kind: input, shape index: {}]
  %s5 = inlined_call_operand.vmem [shape: bf16[256,128], index: 5, kind: input, shape index: {}]
  %s6 = inlined_call_operand.vmem [shape: f32[1,128], index: 6, kind: input, shape index: {}]
  %s7 = inlined_call_operand.hbm [shape: f32[8,128], index: 7, kind: output, shape index: {}]
  %s8 = sld [smem:[#allocation0]]
  $region38: #{custom_trading_model_forward.1} parent=0
    _
  %s10 = ssub.s32 1, %s8
  %s11 = scalar_select 0, %s10, %s8
  $region1: #{custom_trading_model_forward.1} parent=0
    #allocation2 [shape = 'u8[4096]{0}', space=vmem, size = 0x1000, scoped, tag = 'output window, operand 0, single buffered']
    #allocation3 [shape = 's32[1]{0}', space=sflag, size = 0x4, scoped, tag = 'scoped memory for custom_trading_model_forward.1']
    %12 = vsyncpa [#allocation3], 0
    // Predicated region
    $region2: #{custom_trading_model_forward.1} parent=1 // pred_check
      _
    $region3: #{custom_trading_model_forward.1} parent=1 // pred_check_branch
      %14 = sbr.rel (0) target = $region5
    $region4: #{custom_trading_model_forward.1} parent=1 // pred_region
      _
    $region5: #{custom_trading_model_forward.1} parent=1 // pred_fallthru
      _
    // Predicated region
    $region6: #{custom_trading_model_forward.1} parent=1 // pred_check
      _
    $region7: #{custom_trading_model_forward.1} parent=1 // pred_check_branch
      %16 = sbr.rel (0) target = $region9
    $region8: #{custom_trading_model_forward.1} parent=1 // pred_region
      _
    $region9: #{custom_trading_model_forward.1} parent=1 // pred_fallthru
      _
    // Predicated region
    $region10: #{custom_trading_model_forward.1} parent=1 // pred_check
      _
    $region11: #{custom_trading_model_forward.1} parent=1 // pred_check_branch
      %18 = sbr.rel (0) target = $region13
    $region12: #{custom_trading_model_forward.1} parent=1 // pred_region
      _
    $region13: #{custom_trading_model_forward.1} parent=1 // pred_fallthru
      _
    // Predicated region
    $region14: #{custom_trading_model_forward.1} parent=1 // pred_check
      _
    $region15: #{custom_trading_model_forward.1} parent=1 // pred_check_branch
      %20 = sbr.rel (0) target = $region17
    $region16: #{custom_trading_model_forward.1} parent=1 // pred_region
      _
    $region17: #{custom_trading_model_forward.1} parent=1 // pred_fallthru
      _
    // Predicated region
    $region18: #{custom_trading_model_forward.1} parent=1 // pred_check
      _
    $region19: #{custom_trading_model_forward.1} parent=1 // pred_check_branch
      %22 = sbr.rel (0) target = $region21
    $region20: #{custom_trading_model_forward.1} parent=1 // pred_region
      _
    $region21: #{custom_trading_model_forward.1} parent=1 // pred_fallthru
      _
    // Predicated region
    $region22: #{custom_trading_model_forward.1} parent=1 // pred_check
      _
    $region23: #{custom_trading_model_forward.1} parent=1 // pred_check_branch
      %24 = sbr.rel (0) target = $region25
    $region24: #{custom_trading_model_forward.1} parent=1 // pred_region
      _
    $region25: #{custom_trading_model_forward.1} parent=1 // pred_fallthru
      _
    // Predicated region
    $region26: #{custom_trading_model_forward.1} parent=1 // pred_check
      _
    $region27: #{custom_trading_model_forward.1} parent=1 // pred_check_branch
      %26 = sbr.rel (0) target = $region29
    $region28: #{custom_trading_model_forward.1} parent=1 // pred_region
      _
    $region29: #{custom_trading_model_forward.1} parent=1 // pred_fallthru
      _
    %v28 = vld [vmem:[%s0] sm:$0xf]
    %v29 = vld [vmem:[%s1] sm:$0xff]
    %v30 = vld [vmem:[%s1 + $0x8] sm:$0xff]
    %v31 = vld [vmem:[%s1 + $0x10] sm:$0xff]
    %v32 = vld [vmem:[%s1 + $0x18] sm:$0xff]
    %v33 = vld [vmem:[%s2] sm:$0x3]
    %v35 = vperm.slane %v33, 0
    %v36 = vperm.slane %v33, 1
    %v43 = vunpack.c.l.b16 %v29
    %v44 = vunpack.c.h.b16 %v29
    %v45 = vunpack.c.l.b16 %v30
    %v46 = vunpack.c.h.b16 %v30
    %v47 = vunpack.c.l.b16 %v31
    %v48 = vunpack.c.h.b16 %v31
    %v49 = vunpack.c.l.b16 %v32
    %v50 = vunpack.c.h.b16 %v32
    %v51 = vpack.c.b16 %v45, %v43
    %v52 = vpack.c.b16 %v46, %v44
    %v53 = vpack.c.b16 %v49, %v47
    %v54 = vpack.c.b16 %v50, %v48
    %vm59 = vcmask 261120
    %v61 = vsel %vm59, %v28, 0
    %63 = vmatpush.bf16.msra.mxu0 0
    %64 = vmatpush.bf16.msra.mxu0 0
    %65 = vmatpush.bf16.msra.mxu0 0
    %66 = vmatpush.bf16.msra.mxu0 0
    %67 = vmatpush.bf16.msra.mxu0 0
    %68 = vmatpush.bf16.msra.mxu0 0
    %69 = vmatpush.bf16.msra.mxu0 %v53
    %70 = vmatpush.bf16.msra.mxu0 %v51
    %71 = vmatmul.bf16.gmra.mxu0 %v61
    %v72 = vpop.f32.mrf.mxu0
    %v73 = vadd.f32 %v35, %v72
    %v74 = vpop.f32.mrf.mxu0
    %75 = vdwg.mxu0
    %76 = vmatpush.bf16.msra.mxu0 0
    %77 = vmatpush.bf16.msra.mxu0 0
    %78 = vmatpush.bf16.msra.mxu0 0
    %79 = vmatpush.bf16.msra.mxu0 0
    %80 = vmatpush.bf16.msra.mxu0 0
    %81 = vmatpush.bf16.msra.mxu0 0
    %82 = vmatpush.bf16.msra.mxu0 %v54
    %83 = vmatpush.bf16.msra.mxu0 %v52
    %84 = vmatmul.bf16.gmra.mxu0 %v61
    %v85 = vpop.f32.mrf.mxu0
    %v86 = vadd.f32 %v36, %v85
    %v87 = vpop.f32.mrf.mxu0
    %88 = vdwg.mxu0
    %v89 = vmax.f32 %v73, 0.0
    %v90 = vmax.f32 %v86, 0.0
    %v91 = vpack.c.bf16 %v89, %v89
    %v92 = vpack.c.bf16 %v90, %v90
    %v93 = vld [vmem:[%s3] sm:$0xff]
    %v94 = vld [vmem:[%s3 + $0x8] sm:$0xff]
    %v95 = vld [vmem:[%s3 + $0x10] sm:$0xff]
    %v96 = vld [vmem:[%s3 + $0x18] sm:$0xff]
    %v97 = vld [vmem:[%s3 + $0x20] sm:$0xff]
    %v98 = vld [vmem:[%s3 + $0x28] sm:$0xff]
    %v99 = vld [vmem:[%s3 + $0x30] sm:$0xff]
    %v100 = vld [vmem:[%s3 + $0x38] sm:$0xff]
    %v101 = vld [vmem:[%s3 + $0x40] sm:$0xff]
    %v102 = vld [vmem:[%s3 + $0x48] sm:$0xff]
    %v103 = vld [vmem:[%s3 + $0x50] sm:$0xff]
    %v104 = vld [vmem:[%s3 + $0x58] sm:$0xff]
    %v105 = vld [vmem:[%s3 + $0x60] sm:$0xff]
    %v106 = vld [vmem:[%s3 + $0x68] sm:$0xff]
    %v107 = vld [vmem:[%s3 + $0x70] sm:$0xff]
    %v108 = vld [vmem:[%s3 + $0x78] sm:$0xff]
    %v109 = vld [vmem:[%s3 + $0x80] sm:$0xff]
    %v110 = vld [vmem:[%s3 + $0x88] sm:$0xff]
    %v111 = vld [vmem:[%s3 + $0x90] sm:$0xff]
    %v112 = vld [vmem:[%s3 + $0x98] sm:$0xff]
    %v113 = vld [vmem:[%s3 + $0xa0] sm:$0xff]
    %v114 = vld [vmem:[%s3 + $0xa8] sm:$0xff]
    %v115 = vld [vmem:[%s3 + $0xb0] sm:$0xff]
    %v116 = vld [vmem:[%s3 + $0xb8] sm:$0xff]
    %v117 = vld [vmem:[%s3 + $0xc0] sm:$0xff]
    %v118 = vld [vmem:[%s3 + $0xc8] sm:$0xff]
    %v119 = vld [vmem:[%s3 + $0xd0] sm:$0xff]
    %v120 = vld [vmem:[%s3 + $0xd8] sm:$0xff]
    %v121 = vld [vmem:[%s3 + $0xe0] sm:$0xff]
    %v122 = vld [vmem:[%s3 + $0xe8] sm:$0xff]
    %v123 = vld [vmem:[%s3 + $0xf0] sm:$0xff]
    %v124 = vld [vmem:[%s3 + $0xf8] sm:$0xff]
    %v125 = vld [vmem:[%s4] sm:$0x3]
    %v127 = vperm.slane %v125, 0
    %v128 = vperm.slane %v125, 1
    %v163 = vunpack.c.l.b16 %v93
    %v164 = vunpack.c.h.b16 %v93
    %v165 = vunpack.c.l.b16 %v94
    %v166 = vunpack.c.h.b16 %v94
    %v167 = vunpack.c.l.b16 %v95
    %v168 = vunpack.c.h.b16 %v95
    %v169 = vunpack.c.l.b16 %v96
    %v170 = vunpack.c.h.b16 %v96
    %v171 = vunpack.c.l.b16 %v97
    %v172 = vunpack.c.h.b16 %v97
    %v173 = vunpack.c.l.b16 %v98
    %v174 = vunpack.c.h.b16 %v98
    %v175 = vunpack.c.l.b16 %v99
    %v176 = vunpack.c.h.b16 %v99
    %v177 = vunpack.c.l.b16 %v100
    %v178 = vunpack.c.h.b16 %v100
    %v179 = vunpack.c.l.b16 %v101
    %v180 = vunpack.c.h.b16 %v101
    %v181 = vunpack.c.l.b16 %v102
    %v182 = vunpack.c.h.b16 %v102
    %v183 = vunpack.c.l.b16 %v103
    %v184 = vunpack.c.h.b16 %v103
    %v185 = vunpack.c.l.b16 %v104
    %v186 = vunpack.c.h.b16 %v104
    %v187 = vunpack.c.l.b16 %v105
    %v188 = vunpack.c.h.b16 %v105
    %v189 = vunpack.c.l.b16 %v106
    %v190 = vunpack.c.h.b16 %v106
    %v191 = vunpack.c.l.b16 %v107
    %v192 = vunpack.c.h.b16 %v107
    %v193 = vunpack.c.l.b16 %v108
    %v194 = vunpack.c.h.b16 %v108
    %v195 = vunpack.c.l.b16 %v109
    %v196 = vunpack.c.h.b16 %v109
    %v197 = vunpack.c.l.b16 %v110
    %v198 = vunpack.c.h.b16 %v110
    %v199 = vunpack.c.l.b16 %v111
    %v200 = vunpack.c.h.b16 %v111
    %v201 = vunpack.c.l.b16 %v112
    %v202 = vunpack.c.h.b16 %v112
    %v203 = vunpack.c.l.b16 %v113
    %v204 = vunpack.c.h.b16 %v113
    %v205 = vunpack.c.l.b16 %v114
    %v206 = vunpack.c.h.b16 %v114
    %v207 = vunpack.c.l.b16 %v115
    %v208 = vunpack.c.h.b16 %v115
    %v209 = vunpack.c.l.b16 %v116
    %v210 = vunpack.c.h.b16 %v116
    %v211 = vunpack.c.l.b16 %v117
    %v212 = vunpack.c.h.b16 %v117
    %v213 = vunpack.c.l.b16 %v118
    %v214 = vunpack.c.h.b16 %v118
    %v215 = vunpack.c.l.b16 %v119
    %v216 = vunpack.c.h.b16 %v119
    %v217 = vunpack.c.l.b16 %v120
    %v218 = vunpack.c.h.b16 %v120
    %v219 = vunpack.c.l.b16 %v121
    %v220 = vunpack.c.h.b16 %v121
    %v221 = vunpack.c.l.b16 %v122
    %v222 = vunpack.c.h.b16 %v122
    %v223 = vunpack.c.l.b16 %v123
    %v224 = vunpack.c.h.b16 %v123
    %v225 = vunpack.c.l.b16 %v124
    %v226 = vunpack.c.h.b16 %v124
    %v227 = vpack.c.b16 %v165, %v163
    %v228 = vpack.c.b16 %v166, %v164
    %v229 = vpack.c.b16 %v169, %v167
    %v230 = vpack.c.b16 %v170, %v168
    %v231 = vpack.c.b16 %v173, %v171
    %v232 = vpack.c.b16 %v174, %v172
    %v233 = vpack.c.b16 %v177, %v175
    %v234 = vpack.c.b16 %v178, %v176
    %v235 = vpack.c.b16 %v181, %v179
    %v236 = vpack.c.b16 %v182, %v180
    %v237 = vpack.c.b16 %v185, %v183
    %v238 = vpack.c.b16 %v186, %v184
    %v239 = vpack.c.b16 %v189, %v187
    %v240 = vpack.c.b16 %v190, %v188
    %v241 = vpack.c.b16 %v193, %v191
    %v242 = vpack.c.b16 %v194, %v192
    %v243 = vpack.c.b16 %v197, %v195
    %v244 = vpack.c.b16 %v198, %v196
    %v245 = vpack.c.b16 %v201, %v199
    %v246 = vpack.c.b16 %v202, %v200
    %v247 = vpack.c.b16 %v205, %v203
    %v248 = vpack.c.b16 %v206, %v204
    %v249 = vpack.c.b16 %v209, %v207
    %v250 = vpack.c.b16 %v210, %v208
    %v251 = vpack.c.b16 %v213, %v211
    %v252 = vpack.c.b16 %v214, %v212
    %v253 = vpack.c.b16 %v217, %v215
    %v254 = vpack.c.b16 %v218, %v216
    %v255 = vpack.c.b16 %v221, %v219
    %v256 = vpack.c.b16 %v222, %v220
    %v257 = vpack.c.b16 %v225, %v223
    %v258 = vpack.c.b16 %v226, %v224
    %291 = vmatpush.bf16.msra.mxu0 %v241
    %292 = vmatpush.bf16.msra.mxu0 %v239
    %293 = vmatpush.bf16.msra.mxu0 %v237
    %294 = vmatpush.bf16.msra.mxu0 %v235
    %295 = vmatpush.bf16.msra.mxu0 %v233
    %296 = vmatpush.bf16.msra.mxu0 %v231
    %297 = vmatpush.bf16.msra.mxu0 %v229
    %298 = vmatpush.bf16.msra.mxu0 %v227
    %299 = vmatmul.bf16.gmra.mxu0 %v91
    %v300 = vpop.f32.mrf.mxu0
    %v301 = vadd.f32 %v127, %v300
    %v302 = vpop.f32.mrf.mxu0
    %303 = vdwg.mxu0
    %304 = vmatpush.bf16.msra.mxu0 %v257
    %305 = vmatpush.bf16.msra.mxu0 %v255
    %306 = vmatpush.bf16.msra.mxu0 %v253
    %307 = vmatpush.bf16.msra.mxu0 %v251
    %308 = vmatpush.bf16.msra.mxu0 %v249
    %309 = vmatpush.bf16.msra.mxu0 %v247
    %310 = vmatpush.bf16.msra.mxu0 %v245
    %311 = vmatpush.bf16.msra.mxu0 %v243
    %312 = vmatmul.bf16.gmra.mxu0 %v92
    %v313 = vpop.f32.mrf.mxu0
    %v314 = vadd.f32 %v301, %v313
    %v315 = vpop.f32.mrf.mxu0
    %316 = vdwg.mxu0
    %317 = vmatpush.bf16.msra.mxu0 %v242
    %318 = vmatpush.bf16.msra.mxu0 %v240
    %319 = vmatpush.bf16.msra.mxu0 %v238
    %320 = vmatpush.bf16.msra.mxu0 %v236
    %321 = vmatpush.bf16.msra.mxu0 %v234
    %322 = vmatpush.bf16.msra.mxu0 %v232
    %323 = vmatpush.bf16.msra.mxu0 %v230
    %324 = vmatpush.bf16.msra.mxu0 %v228
    %325 = vmatmul.bf16.gmra.mxu0 %v91
    %v326 = vpop.f32.mrf.mxu0
    %v327 = vadd.f32 %v128, %v326
    %v328 = vpop.f32.mrf.mxu0
    %329 = vdwg.mxu0
    %330 = vmatpush.bf16.msra.mxu0 %v258
    %331 = vmatpush.bf16.msra.mxu0 %v256
    %332 = vmatpush.bf16.msra.mxu0 %v254
    %333 = vmatpush.bf16.msra.mxu0 %v252
    %334 = vmatpush.bf16.msra.mxu0 %v250
    %335 = vmatpush.bf16.msra.mxu0 %v248
    %336 = vmatpush.bf16.msra.mxu0 %v246
    %337 = vmatpush.bf16.msra.mxu0 %v244
    %338 = vmatmul.bf16.gmra.mxu0 %v92
    %v339 = vpop.f32.mrf.mxu0
    %v340 = vadd.f32 %v327, %v339
    %v341 = vpop.f32.mrf.mxu0
    %342 = vdwg.mxu0
    %v343 = vmax.f32 %v314, 0.0
    %v344 = vmax.f32 %v340, 0.0
    %v345 = vpack.c.bf16 %v343, %v343
    %v346 = vpack.c.bf16 %v344, %v344
    %v347 = vld [vmem:[%s5] sm:$0xf]
    %v348 = vld [vmem:[%s5 + $0x4] sm:$0xf]
    %v349 = vld [vmem:[%s5 + $0x8] sm:$0xf]
    %v350 = vld [vmem:[%s5 + $0xc] sm:$0xf]
    %v351 = vld [vmem:[%s5 + $0x10] sm:$0xf]
    %v352 = vld [vmem:[%s5 + $0x14] sm:$0xf]
    %v353 = vld [vmem:[%s5 + $0x18] sm:$0xf]
    %v354 = vld [vmem:[%s5 + $0x1c] sm:$0xf]
    %v355 = vld [vmem:[%s5 + $0x20] sm:$0xf]
    %v356 = vld [vmem:[%s5 + $0x24] sm:$0xf]
    %v357 = vld [vmem:[%s5 + $0x28] sm:$0xf]
    %v358 = vld [vmem:[%s5 + $0x2c] sm:$0xf]
    %v359 = vld [vmem:[%s5 + $0x30] sm:$0xf]
    %v360 = vld [vmem:[%s5 + $0x34] sm:$0xf]
    %v361 = vld [vmem:[%s5 + $0x38] sm:$0xf]
    %v362 = vld [vmem:[%s5 + $0x3c] sm:$0xf]
    %v363 = vld [vmem:[%s5 + $0x40] sm:$0xf]
    %v364 = vld [vmem:[%s5 + $0x44] sm:$0xf]
    %v365 = vld [vmem:[%s5 + $0x48] sm:$0xf]
    %v366 = vld [vmem:[%s5 + $0x4c] sm:$0xf]
    %v367 = vld [vmem:[%s5 + $0x50] sm:$0xf]
    %v368 = vld [vmem:[%s5 + $0x54] sm:$0xf]
    %v369 = vld [vmem:[%s5 + $0x58] sm:$0xf]
    %v370 = vld [vmem:[%s5 + $0x5c] sm:$0xf]
    %v371 = vld [vmem:[%s5 + $0x60] sm:$0xf]
    %v372 = vld [vmem:[%s5 + $0x64] sm:$0xf]
    %v373 = vld [vmem:[%s5 + $0x68] sm:$0xf]
    %v374 = vld [vmem:[%s5 + $0x6c] sm:$0xf]
    %v375 = vld [vmem:[%s5 + $0x70] sm:$0xf]
    %v376 = vld [vmem:[%s5 + $0x74] sm:$0xf]
    %v377 = vld [vmem:[%s5 + $0x78] sm:$0xf]
    %v378 = vld [vmem:[%s5 + $0x7c] sm:$0xf]
    %v379 = vld [vmem:[%s6] sm:$0x1]
    %v381 = vperm.slane %v379, 0
    %v415 = vunpack.c.l.b16 %v347
    %v416 = vunpack.c.l.b16 %v348
    %v417 = vunpack.c.l.b16 %v349
    %v418 = vunpack.c.l.b16 %v350
    %v419 = vunpack.c.l.b16 %v351
    %v420 = vunpack.c.l.b16 %v352
    %v421 = vunpack.c.l.b16 %v353
    %v422 = vunpack.c.l.b16 %v354
    %v423 = vunpack.c.l.b16 %v355
    %v424 = vunpack.c.l.b16 %v356
    %v425 = vunpack.c.l.b16 %v357
    %v426 = vunpack.c.l.b16 %v358
    %v427 = vunpack.c.l.b16 %v359
    %v428 = vunpack.c.l.b16 %v360
    %v429 = vunpack.c.l.b16 %v361
    %v430 = vunpack.c.l.b16 %v362
    %v431 = vunpack.c.l.b16 %v363
    %v432 = vunpack.c.l.b16 %v364
    %v433 = vunpack.c.l.b16 %v365
    %v434 = vunpack.c.l.b16 %v366
    %v435 = vunpack.c.l.b16 %v367
    %v436 = vunpack.c.l.b16 %v368
    %v437 = vunpack.c.l.b16 %v369
    %v438 = vunpack.c.l.b16 %v370
    %v439 = vunpack.c.l.b16 %v371
    %v440 = vunpack.c.l.b16 %v372
    %v441 = vunpack.c.l.b16 %v373
    %v442 = vunpack.c.l.b16 %v374
    %v443 = vunpack.c.l.b16 %v375
    %v444 = vunpack.c.l.b16 %v376
    %v445 = vunpack.c.l.b16 %v377
    %v446 = vunpack.c.l.b16 %v378
    %v447 = vpack.c.b16 %v416, %v415
    %v448 = vpack.c.b16 %v418, %v417
    %v449 = vpack.c.b16 %v420, %v419
    %v450 = vpack.c.b16 %v422, %v421
    %v451 = vpack.c.b16 %v424, %v423
    %v452 = vpack.c.b16 %v426, %v425
    %v453 = vpack.c.b16 %v428, %v427
    %v454 = vpack.c.b16 %v430, %v429
    %v455 = vpack.c.b16 %v432, %v431
    %v456 = vpack.c.b16 %v434, %v433
    %v457 = vpack.c.b16 %v436, %v435
    %v458 = vpack.c.b16 %v438, %v437
    %v459 = vpack.c.b16 %v440, %v439
    %v460 = vpack.c.b16 %v442, %v441
    %v461 = vpack.c.b16 %v444, %v443
    %v462 = vpack.c.b16 %v446, %v445
    %479 = vmatpush.bf16.msra.mxu0 %v454
    %480 = vmatpush.bf16.msra.mxu0 %v453
    %481 = vmatpush.bf16.msra.mxu0 %v452
    %482 = vmatpush.bf16.msra.mxu0 %v451
    %483 = vmatpush.bf16.msra.mxu0 %v450
    %484 = vmatpush.bf16.msra.mxu0 %v449
    %485 = vmatpush.bf16.msra.mxu0 %v448
    %486 = vmatpush.bf16.msra.mxu0 %v447
    %487 = vmatmul.bf16.gmra.mxu0 %v345
    %v488 = vpop.f32.mrf.mxu0
    %v489 = vadd.f32 %v381, %v488
    %v490 = vpop.f32.mrf.mxu0
    %491 = vdwg.mxu0
    %492 = vmatpush.bf16.msra.mxu0 %v462
    %493 = vmatpush.bf16.msra.mxu0 %v461
    %494 = vmatpush.bf16.msra.mxu0 %v460
    %495 = vmatpush.bf16.msra.mxu0 %v459
    %496 = vmatpush.bf16.msra.mxu0 %v458
    %497 = vmatpush.bf16.msra.mxu0 %v457
    %498 = vmatpush.bf16.msra.mxu0 %v456
    %499 = vmatpush.bf16.msra.mxu0 %v455
    %500 = vmatmul.bf16.gmra.mxu0 %v346
    %v501 = vpop.f32.mrf.mxu0
    %v502 = vadd.f32 %v489, %v501
    %v503 = vpop.f32.mrf.mxu0
    %504 = vdwg.mxu0
    %505 = vst [vmem:[#allocation2] sm:$0xff] %v502
    // Predicated region
    $region30: #{custom_trading_model_forward.1} parent=1 // pred_check
      _
    $region31: #{custom_trading_model_forward.1} parent=1 // pred_check_branch
      %507 = sbr.rel (0) target = $region33
    $region32: #{custom_trading_model_forward.1} parent=1 // pred_region
      %509 = vsyncadd [#allocation3], 0
      %s511 = sshll.u32 [#allocation2], 4
      %s512 = int_to_ptr.vmem [resolvable:$true] %s511
      %s513 = sshll.u32 %s7, 4
      %s514 = int_to_ptr.hbm [resolvable:$true] %s513
      %516 = dma.vmem_to_hbm [thread:$0]  %s512, 128, %s514, [#allocation3]
    $region33: #{custom_trading_model_forward.1} parent=1 // pred_fallthru
      _
    // Predicated region
    $region34: #{custom_trading_model_forward.1} parent=1 // pred_check
      _
    $region35: #{custom_trading_model_forward.1} parent=1 // pred_check_branch
      %518 = sbr.rel (0) target = $region37
    $region36: #{custom_trading_model_forward.1} parent=1 // pred_region
      %520 = dma.done [#allocation3], 128
    $region37: #{custom_trading_model_forward.1} parent=1 // pred_fallthru
      _
    %521 = vsyncpa [#allocation3], 1

</llo_original>
